<compile_context>
chip_gen: v5e
topology: v5e:2x2
jax: 0.10.0
libtpu: 0.0.40
codegen_flags: <defaults>
</compile_context>

<pallas_src>
import functools

import jax
import jax.numpy as jnp
from jax.experimental import pallas as pl
from jax.experimental.pallas import tpu as pltpu

_NEG_BIG = -1e30  # large negative (finite) padding for class columns


def _lmf_kernel(logits_ref, labels_ref, m_ref, out_ref, *,
                s, gamma, alpha, beta, n_valid, tile_n):
    """Per-tile partial sum of alpha*LDAM_i + beta*Focal_i over valid rows."""
    x = logits_ref[...].astype(jnp.float32)       # (tile_n, c_pad)
    labels = labels_ref[...]                      # (tile_n, 1) int32
    m_list = m_ref[...].astype(jnp.float32)       # (1, c_pad)

    tn, cp = x.shape
    class_ids = jax.lax.broadcasted_iota(jnp.int32, (tn, cp), 1)
    one_hot = (class_ids == labels).astype(jnp.float32)          # (tile_n, c_pad)

    # Rows past the true batch size are padding -> mask them out of the sums.
    row_ids = (pl.program_id(0) * tile_n
               + jax.lax.broadcasted_iota(jnp.int32, (tn, 1), 0))
    valid = (row_ids < n_valid).astype(jnp.float32)               # (tile_n, 1)

    # Shared masked gathers (one multiply + one lane-reduce each).
    batch_m = jnp.sum(one_hot * m_list, axis=-1, keepdims=True)   # m_list[label]
    x_y = jnp.sum(x * one_hot, axis=-1, keepdims=True)            # logit at label

    # ---------------- LDAM branch ----------------
    z = s * (x - batch_m * one_hot)
    z_max = jnp.max(z, axis=-1, keepdims=True)
    lse_z = z_max + jnp.log(jnp.sum(jnp.exp(z - z_max), axis=-1, keepdims=True))
    # z at the true class is s * (x_y - batch_m)  (algebraic, no extra reduce)
    ce_ldam = lse_z - s * (x_y - batch_m)                         # (tile_n, 1)

    # ---------------- Focal branch ----------------
    x_max = jnp.max(x, axis=-1, keepdims=True)
    lse_x = x_max + jnp.log(jnp.sum(jnp.exp(x - x_max), axis=-1, keepdims=True))
    ce = lse_x - x_y                                              # (tile_n, 1)
    pt = jnp.exp(-ce)
    one_minus_pt = 1.0 - pt
    g = float(gamma)
    if g == 0.0:
        focal_w = jnp.ones_like(one_minus_pt)
    elif g == float(int(g)) and int(g) >= 1:
        # integer gamma -> repeated multiplies (VPU), no extra transcendentals
        focal_w = one_minus_pt
        for _ in range(int(g) - 1):
            focal_w = focal_w * one_minus_pt
    else:
        focal_w = jnp.power(jnp.maximum(one_minus_pt, 0.0), g)
    focal = focal_w * ce

    partial = jnp.sum(valid * (alpha * ce_ldam + beta * focal))
    # Lane-dense store of the per-tile partial (broadcast across 128 lanes).
    out_ref[...] = jnp.broadcast_to(partial.astype(jnp.float32), out_ref.shape)


def lmf_loss(logits, labels, cls_num_list, *,
             max_m=0.5, s=30.0, gamma=2.0, alpha=1.0, beta=1.0, tile_n=512):
    """alpha * LDAM(logits, labels) + beta * Focal(logits, labels).

    logits: (N, C) float, labels: (N,) int, cls_num_list: (C,) per-class counts.
    """
    n, c = logits.shape

    # Lane-dense class axis.
    c_pad = ((c + 127) // 128) * 128

    # Tile over the batch axis; keep a comfortably small VMEM footprint so the
    # double-buffered tiles fit on every generation (incl. v7x's 64 MiB VMEM).
    bytes_per_row = c_pad * 4
    budget_per_buf = 8 * 1024 * 1024
    max_rows = max(8, (budget_per_buf // bytes_per_row) // 8 * 8)
    tn = max(8, min(int(tile_n), max_rows))
    tn = min(tn, ((n + 7) // 8) * 8)       # don't exceed the (8-padded) batch
    tn = ((tn + 7) // 8) * 8
    num_tiles = -(-n // tn)
    n_pad = num_tiles * tn

    # LDAM per-class margins: m_j = 1 / n_j^(1/4), scaled so max margin == max_m.
    m_list = 1.0 / jnp.sqrt(jnp.sqrt(jnp.asarray(cls_num_list, jnp.float32)))
    m_list = m_list * (max_m / jnp.max(m_list))
    m_list = m_list.reshape(1, c)
    if c_pad != c:
        m_list = jnp.pad(m_list, ((0, 0), (0, c_pad - c)), constant_values=0.0)

    # Keep logits in their original dtype (no wrapper f32 cast); pad class axis
    # with a huge negative value, then pad rows (masked inside the kernel).
    logits_p = logits
    if c_pad != c:
        logits_p = jnp.pad(logits_p, ((0, 0), (0, c_pad - c)),
                           constant_values=_NEG_BIG)
    if n_pad != n:
        logits_p = jnp.pad(logits_p, ((0, n_pad - n), (0, 0)),
                           constant_values=0.0)

    labels_p = labels.astype(jnp.int32)
    if n_pad != n:
        labels_p = jnp.pad(labels_p, (0, n_pad - n), constant_values=0)
    labels_2d = labels_p.reshape(n_pad, 1)

    kernel = functools.partial(
        _lmf_kernel, s=float(s), gamma=float(gamma),
        alpha=float(alpha), beta=float(beta), n_valid=int(n), tile_n=int(tn))

    out = pl.pallas_call(
        kernel,
        out_shape=jax.ShapeDtypeStruct((1, num_tiles * 128), jnp.float32),
        grid=(num_tiles,),
        in_specs=[
            pl.BlockSpec((tn, c_pad), lambda i: (i, 0)),
            pl.BlockSpec((tn, 1), lambda i: (i, 0)),
            pl.BlockSpec((1, c_pad), lambda i: (0, 0)),
        ],
        out_specs=pl.BlockSpec((1, 128), lambda i: (0, i)),
        compiler_params=pltpu.CompilerParams(
            dimension_semantics=("parallel",),
            vmem_limit_bytes=32 * 1024 * 1024),
    )(logits_p, labels_2d, m_list)

    partials = out.reshape(num_tiles, 128)[:, 0]
    return (jnp.sum(partials) / jnp.float32(n)).astype(jnp.float32)


def _reference(logits, labels, cls_num_list, *,
               max_m=0.5, s=30.0, gamma=2.0, alpha=1.0, beta=1.0):
    """Pure-JAX reference mirroring PyTorch LDAM / Focal / LMF semantics."""
    n, c = logits.shape
    x = logits.astype(jnp.float32)
    m_list = 1.0 / jnp.sqrt(jnp.sqrt(jnp.asarray(cls_num_list, jnp.float32)))
    m_list = m_list * (max_m / jnp.max(m_list))
    one_hot = jax.nn.one_hot(labels, c, dtype=jnp.float32)

    batch_m = m_list[labels][:, None]
    x_m = x - batch_m * one_hot
    z = s * x_m
    logp_z = jax.nn.log_softmax(z, axis=-1)
    loss_ldam = -jnp.mean(jnp.sum(one_hot * logp_z, axis=-1))

    logp = jax.nn.log_softmax(x, axis=-1)
    ce = -jnp.sum(one_hot * logp, axis=-1)
    pt = jnp.exp(-ce)
    loss_focal = jnp.mean((1.0 - pt) ** gamma * ce)

    return alpha * loss_ldam + beta * loss_focal


if __name__ == "__main__":
    key = jax.random.PRNGKey(0)
    k1, k2, k3, k4 = jax.random.split(key, 4)

    # Case 1: small toy case (8 samples, 16 classes).
    N, C = 8, 16
    logits = jax.random.normal(k1, (N, C), dtype=jnp.float32)
    labels = jax.random.randint(k2, (N,), 0, C, dtype=jnp.int32)
    cls_num_list = jnp.array([100, 80, 60, 50, 40, 30, 25, 20,
                              15, 12, 10, 8, 6, 5, 4, 2], dtype=jnp.float32)

    out = lmf_loss(logits, labels, cls_num_list,
                   max_m=0.5, s=30.0, gamma=2.0, alpha=1.0, beta=1.0)
    out = jax.block_until_ready(out)
    ref = _reference(logits, labels, cls_num_list,
                     max_m=0.5, s=30.0, gamma=2.0, alpha=1.0, beta=1.0)
    assert jnp.allclose(out, ref, rtol=1e-5, atol=1e-5), (out, ref)

    # Case 2: ragged shapes that exercise class padding, row masking and a
    # multi-tile grid (4 tiles of 32 rows for 100 samples, 37 classes).
    N2, C2 = 100, 37
    logits2 = jax.random.normal(k3, (N2, C2), dtype=jnp.float32)
    labels2 = jax.random.randint(k4, (N2,), 0, C2, dtype=jnp.int32)
    cls_num_list2 = jnp.linspace(200.0, 3.0, C2, dtype=jnp.float32)

    out2 = lmf_loss(logits2, labels2, cls_num_list2,
                    max_m=0.5, s=30.0, gamma=2.0, alpha=0.7, beta=1.3,
                    tile_n=32)
    out2 = jax.block_until_ready(out2)
    ref2 = _reference(logits2, labels2, cls_num_list2,
                      max_m=0.5, s=30.0, gamma=2.0, alpha=0.7, beta=1.3)
    assert jnp.allclose(out2, ref2, rtol=1e-5, atol=1e-5), (out2, ref2)

    print("KERNEL_OK")
</pallas_src>

<mosaic_0001>
module attributes {stable_mosaic.version = 11 : i64} {
  func.func @_lmf_kernel(%arg0: i32, %arg1: memref<8x128xf32, #tpu.memory_space<vmem>>, %arg2: memref<8x1xi32, #tpu.memory_space<vmem>>, %arg3: memref<1x128xf32, #tpu.memory_space<vmem>>, %arg4: memref<1x128xf32, #tpu.memory_space<vmem>>) attributes {dimension_semantics = [#tpu.dimension_semantics<parallel>], iteration_bounds = array<i64: 1>, scalar_prefetch = 0 : i64, scratch_operands = 0 : i64, tpu.core_type = #tpu.core_type<tc>, window_params = [{transform_indices = @transform_0, window_bounds = array<i64: 8, 128>}, {transform_indices = @transform_1, window_bounds = array<i64: 8, 1>}, {pipeline_mode = #tpu.pipeline_mode<synchronous>, transform_indices = @transform_2, window_bounds = array<i64: 1, 128>}, {transform_indices = @transform_3, window_bounds = array<i64: 1, 128>}]} {
    %c0 = arith.constant 0 : index
    %c0_0 = arith.constant 0 : index
    %0 = vector.load %arg1[%c0, %c0_0] : memref<8x128xf32, #tpu.memory_space<vmem>>, vector<8x128xf32>
    %c0_1 = arith.constant 0 : index
    %c0_2 = arith.constant 0 : index
    %1 = vector.load %arg2[%c0_1, %c0_2] : memref<8x1xi32, #tpu.memory_space<vmem>>, vector<8x1xi32>
    %c0_3 = arith.constant 0 : index
    %c0_4 = arith.constant 0 : index
    %2 = vector.load %arg3[%c0_3, %c0_4] : memref<1x128xf32, #tpu.memory_space<vmem>>, vector<1x128xf32>
    %3 = tpu.iota {dimensions = array<i32: 1>} : vector<8x128xi32>
    %4 = vector.broadcast %1 : vector<8x1xi32> to vector<8x128xi32>
    %5 = arith.cmpi eq, %3, %4 : vector<8x128xi32>
    %6 = arith.extui %5 : vector<8x128xi1> to vector<8x128xi32>
    %7 = arith.sitofp %6 : vector<8x128xi32> to vector<8x128xf32>
    %c8_i32 = arith.constant 8 : i32
    %8 = arith.muli %arg0, %c8_i32 : i32
    %9 = tpu.iota {dimensions = array<i32: 0>} : vector<8x1xi32>
    %10 = vector.broadcast %8 : i32 to vector<8x1xi32>
    %11 = arith.addi %10, %9 : vector<8x1xi32>
    %c8_i32_5 = arith.constant 8 : i32
    %12 = vector.broadcast %c8_i32_5 : i32 to vector<8x1xi32>
    %13 = arith.cmpi slt, %11, %12 : vector<8x1xi32>
    %14 = arith.extui %13 : vector<8x1xi1> to vector<8x1xi32>
    %15 = arith.sitofp %14 : vector<8x1xi32> to vector<8x1xf32>
    %16 = vector.broadcast %2 : vector<1x128xf32> to vector<8x128xf32>
    %17 = arith.mulf %7, %16 : vector<8x128xf32>
    %cst = arith.constant dense<0.000000e+00> : vector<8xf32>
    %18 = vector.multi_reduction <add>, %17, %cst [1] : vector<8x128xf32> to vector<8xf32>
    %19 = vector.shape_cast %18 : vector<8xf32> to vector<8x1xf32>
    %20 = arith.mulf %0, %7 : vector<8x128xf32>
    %cst_6 = arith.constant dense<0.000000e+00> : vector<8xf32>
    %21 = vector.multi_reduction <add>, %20, %cst_6 [1] : vector<8x128xf32> to vector<8xf32>
    %22 = vector.shape_cast %21 : vector<8xf32> to vector<8x1xf32>
    %23 = vector.broadcast %19 : vector<8x1xf32> to vector<8x128xf32>
    %24 = arith.mulf %23, %7 : vector<8x128xf32>
    %25 = arith.subf %0, %24 : vector<8x128xf32>
    %cst_7 = arith.constant 3.000000e+01 : f32
    %26 = vector.broadcast %cst_7 : f32 to vector<8x128xf32>
    %27 = arith.mulf %26, %25 : vector<8x128xf32>
    %cst_8 = arith.constant dense<0xFF800000> : vector<8xf32>
    %28 = vector.multi_reduction <maximumf>, %27, %cst_8 [1] : vector<8x128xf32> to vector<8xf32>
    %29 = vector.shape_cast %28 : vector<8xf32> to vector<8x1xf32>
    %30 = vector.broadcast %29 : vector<8x1xf32> to vector<8x128xf32>
    %31 = arith.subf %27, %30 : vector<8x128xf32>
    %32 = math.exp %31 : vector<8x128xf32>
    %cst_9 = arith.constant dense<0.000000e+00> : vector<8xf32>
    %33 = vector.multi_reduction <add>, %32, %cst_9 [1] : vector<8x128xf32> to vector<8xf32>
    %34 = vector.shape_cast %33 : vector<8xf32> to vector<8x1xf32>
    %35 = math.log %34 : vector<8x1xf32>
    %36 = arith.addf %29, %35 : vector<8x1xf32>
    %37 = arith.subf %22, %19 : vector<8x1xf32>
    %cst_10 = arith.constant 3.000000e+01 : f32
    %38 = vector.broadcast %cst_10 : f32 to vector<8x1xf32>
    %39 = arith.mulf %38, %37 : vector<8x1xf32>
    %40 = arith.subf %36, %39 : vector<8x1xf32>
    %cst_11 = arith.constant dense<0xFF800000> : vector<8xf32>
    %41 = vector.multi_reduction <maximumf>, %0, %cst_11 [1] : vector<8x128xf32> to vector<8xf32>
    %42 = vector.shape_cast %41 : vector<8xf32> to vector<8x1xf32>
    %43 = vector.broadcast %42 : vector<8x1xf32> to vector<8x128xf32>
    %44 = arith.subf %0, %43 : vector<8x128xf32>
    %45 = math.exp %44 : vector<8x128xf32>
    %cst_12 = arith.constant dense<0.000000e+00> : vector<8xf32>
    %46 = vector.multi_reduction <add>, %45, %cst_12 [1] : vector<8x128xf32> to vector<8xf32>
    %47 = vector.shape_cast %46 : vector<8xf32> to vector<8x1xf32>
    %48 = math.log %47 : vector<8x1xf32>
    %49 = arith.addf %42, %48 : vector<8x1xf32>
    %50 = arith.subf %49, %22 : vector<8x1xf32>
    %cst_13 = arith.constant 0.000000e+00 : f32
    %51 = vector.broadcast %cst_13 : f32 to vector<8x1xf32>
    %52 = arith.subf %51, %50 : vector<8x1xf32>
    %53 = math.exp %52 : vector<8x1xf32>
    %cst_14 = arith.constant 1.000000e+00 : f32
    %54 = vector.broadcast %cst_14 : f32 to vector<8x1xf32>
    %55 = arith.subf %54, %53 : vector<8x1xf32>
    %56 = arith.mulf %55, %55 : vector<8x1xf32>
    %57 = arith.mulf %56, %50 : vector<8x1xf32>
    %cst_15 = arith.constant 1.000000e+00 : f32
    %58 = vector.broadcast %cst_15 : f32 to vector<8x1xf32>
    %59 = arith.mulf %58, %40 : vector<8x1xf32>
    %cst_16 = arith.constant 1.000000e+00 : f32
    %60 = vector.broadcast %cst_16 : f32 to vector<8x1xf32>
    %61 = arith.mulf %60, %57 : vector<8x1xf32>
    %62 = arith.addf %59, %61 : vector<8x1xf32>
    %63 = arith.mulf %15, %62 : vector<8x1xf32>
    %64 = vector.shape_cast %63 : vector<8x1xf32> to vector<1x8x1xf32>
    %cst_17 = arith.constant dense<0.000000e+00> : vector<1xf32>
    %65 = vector.multi_reduction <add>, %64, %cst_17 [1, 2] : vector<1x8x1xf32> to vector<1xf32>
    %66 = vector.shape_cast %65 : vector<1xf32> to vector<1x1x1xf32>
    %67 = vector.extract %66[0, 0, 0] : f32 from vector<1x1x1xf32>
    %68 = vector.broadcast %67 : f32 to vector<1x128xf32>
    %c0_18 = arith.constant 0 : index
    %c0_19 = arith.constant 0 : index
    %69 = vector.load %arg4[%c0_18, %c0_19] : memref<1x128xf32, #tpu.memory_space<vmem>>, vector<1x128xf32>
    tpu.vector_store %arg4[%c0_18, %c0_19], %68 {strides = array<i32>} : memref<1x128xf32, #tpu.memory_space<vmem>>, vector<1x128xf32>,
    return
  }
  func.func @transform_0(%arg0: i32) -> (i32, i32) {
    %c0_i32 = arith.constant 0 : i32
    %c0_i32_0 = arith.constant 0 : i32
    return %arg0, %c0_i32 : i32, i32
  }
  func.func @transform_1(%arg0: i32) -> (i32, i32) {
    %c0_i32 = arith.constant 0 : i32
    %c0_i32_0 = arith.constant 0 : i32
    return %arg0, %c0_i32 : i32, i32
  }
  func.func @transform_2(%arg0: i32) -> (i32, i32) {
    %c0_i32 = arith.constant 0 : i32
    %c0_i32_0 = arith.constant 0 : i32
    %c0_i32_1 = arith.constant 0 : i32
    return %c0_i32, %c0_i32_0 : i32, i32
  }
  func.func @transform_3(%arg0: i32) -> (i32, i32) {
    %c0_i32 = arith.constant 0 : i32
    %c0_i32_0 = arith.constant 0 : i32
    return %c0_i32, %arg0 : i32, i32
  }
}

</mosaic_0001>

<llo_original>
// kernel: tpu_custom_call.1
$region0: #{tpu_custom_call.1}
  #allocation0 [shape = 'u32[]', space=smem, size = 0x4, offset = 0x4, fixed_abs, tag = 'smem constant byte address 0x4 - core index']
  #allocation1 [shape = 'u32[72,128]{1,0:T(1,128)}', space=vmem, size = 0x9000, scoped, tag = 'internal scratch']
  %s0 = inlined_call_operand.vmem [shape: f32[8,128], index: 0, kind: input, shape index: {}]
  %s1 = inlined_call_operand.vmem [shape: s32[8,1], index: 1, kind: input, shape index: {}]
  %s2 = inlined_call_operand.vmem [shape: f32[1,128], index: 2, kind: input, shape index: {}]
  %s3 = inlined_call_operand.hbm [shape: f32[1,128], index: 3, kind: output, shape index: {}]
  %s4 = sld [smem:[#allocation0]]
  $region22: #{tpu_custom_call.1} parent=0
    _
  %s6 = ssub.s32 1, %s4
  %s7 = scalar_select 0, %s6, %s4
  $region1: #{tpu_custom_call.1} parent=0
    #allocation2 [shape = 'u8[512]{0}', space=vmem, size = 0x400, scoped, tag = 'output window, operand 0, single buffered']
    #allocation3 [shape = 's32[1]{0}', space=sflag, size = 0x4, scoped, tag = 'scoped memory for tpu_custom_call.1']
    %8 = vsyncpa [#allocation3], 0
    // Predicated region
    $region2: #{tpu_custom_call.1} parent=1 // pred_check
      _
    $region3: #{tpu_custom_call.1} parent=1 // pred_check_branch
      %10 = sbr.rel (0) target = $region5
    $region4: #{tpu_custom_call.1} parent=1 // pred_region
      _
    $region5: #{tpu_custom_call.1} parent=1 // pred_fallthru
      _
    // Predicated region
    $region6: #{tpu_custom_call.1} parent=1 // pred_check
      _
    $region7: #{tpu_custom_call.1} parent=1 // pred_check_branch
      %12 = sbr.rel (0) target = $region9
    $region8: #{tpu_custom_call.1} parent=1 // pred_region
      _
    $region9: #{tpu_custom_call.1} parent=1 // pred_fallthru
      _
    // Predicated region
    $region10: #{tpu_custom_call.1} parent=1 // pred_check
      _
    $region11: #{tpu_custom_call.1} parent=1 // pred_check_branch
      %14 = sbr.rel (0) target = $region13
    $region12: #{tpu_custom_call.1} parent=1 // pred_region
      _
    $region13: #{tpu_custom_call.1} parent=1 // pred_fallthru
      _
    %v15 = vld [vmem:[%s0] sm:$0xff]
    %v16 = vld [vmem:[%s1] sm:$0xff]
    %v17 = vld [vmem:[%s2] sm:$0x1]
    %v18 = vlaneseq
    %v19 = vand.u32 %v18, 127
    %20 = vset.pattern.permute.xlu0 0
    %21 = vperm.xlu0 %20, %v16
    %v22 = vpop.permute.xlu0 %21
    %vm23 = vcmp.eq.s32.totalorder %v19, %v22
    %v24 = vsel %vm23, 1, 0
    %v25 = vcvt.s32.f32 %v24
    %s26 = smul.u32 0, 8
    %v27 = vlaneseq
    %v28 = vshrl.u32 %v27, 7
    %v29 = vstv %s26
    %v30 = vadd.s32 %v29, %v28
    %vm31 = vcmp.lt.s32.totalorder %v30, 8
    %v32 = vsel %vm31, 1, 0
    %v33 = vcvt.s32.f32 %v32
    %v35 = vperm.slane %v17, 0
    %v37 = vmul.f32 %v25, %v35
    %38 = vadd.xlane.f32.xlu0 %v37
    %v39 = vpop.xlane.xlu0 %38
    %v40 = vmul.f32 %v15, %v25
    %41 = vadd.xlane.f32.xlu0 %v40
    %v42 = vpop.xlane.xlu0 %41
    %v43 = vmul.f32 %v39, %v25
    %v44 = vsub.f32 %v15, %v43
    %v45 = vmul.f32 %v44, 30.0
    %46 = vmax.xlane.f32.xlu0 %v45
    %v47 = vpop.xlane.xlu0 %46
    %v48 = vsub.f32 %v45, %v47
    %v49 = vmul.f32 %v48, 1.442695
    %v50 = vpow.pop %v49
    %51 = vadd.xlane.f32.xlu0 %v50
    %v52 = vpop.xlane.xlu0 %51
    %v53 = vlog2.pop %v52
    %v54 = vmul.f32 %v53, 0.6931472
    %v55 = vadd.f32 %v47, %v54
    %v56 = vsub.f32 %v42, %v39
    %v57 = vmul.f32 %v56, 30.0
    %v58 = vsub.f32 %v55, %v57
    %59 = vmax.xlane.f32.xlu0 %v15
    %v60 = vpop.xlane.xlu0 %59
    %v61 = vsub.f32 %v15, %v60
    %v62 = vmul.f32 %v61, 1.442695
    %v63 = vpow.pop %v62
    %64 = vadd.xlane.f32.xlu0 %v63
    %v65 = vpop.xlane.xlu0 %64
    %v66 = vlog2.pop %v65
    %v67 = vmul.f32 %v66, 0.6931472
    %v68 = vadd.f32 %v60, %v67
    %v69 = vsub.f32 %v68, %v42
    %v70 = vsub.f32 0.0, %v69
    %v71 = vmul.f32 %v70, 1.442695
    %v72 = vpow.pop %v71
    %v73 = vsub.f32 1.0, %v72
    %v74 = vmul.f32 %v73, %v73
    %v75 = vmul.f32 %v74, %v69
    %v76 = vadd.f32 %v58, %v75
    %v77 = vmul.f32 %v33, %v76
    %vm78 = vcmask 7168
    %v79 = vsel %vm78, %v77, 0.0
    %80 = vadd.xlane.f32.xlu0 %v79
    %v81 = vpop.xlane.xlu0 %80
    %v82 = vrot.slane %v81, 4
    %v83 = vadd.f32 %v81, %v82
    %v84 = vrot.slane %v83, 2
    %v85 = vadd.f32 %v83, %v84
    %v86 = vrot.slane %v85, 1
    %v87 = vadd.f32 %v85, %v86
    %s88 = vtos %v87
    %v89 = vstv %s88
    %90 = vst [vmem:[#allocation2] sm:$0x1] %v89
    // Predicated region
    $region14: #{tpu_custom_call.1} parent=1 // pred_check
      _
    $region15: #{tpu_custom_call.1} parent=1 // pred_check_branch
      %92 = sbr.rel (0) target = $region17
    $region16: #{tpu_custom_call.1} parent=1 // pred_region
      %94 = vsyncadd [#allocation3], 0
      %s96 = sshll.u32 [#allocation2], 4
      %s97 = int_to_ptr.vmem [resolvable:$true] %s96
      %s98 = sshll.u32 %s3, 4
      %s99 = int_to_ptr.hbm [resolvable:$true] %s98
      %101 = dma.vmem_to_hbm [thread:$0]  %s97, 16, %s99, [#allocation3]
    $region17: #{tpu_custom_call.1} parent=1 // pred_fallthru
      _
    // Predicated region
    $region18: #{tpu_custom_call.1} parent=1 // pred_check
      _
    $region19: #{tpu_custom_call.1} parent=1 // pred_check_branch
      %103 = sbr.rel (0) target = $region21
    $region20: #{tpu_custom_call.1} parent=1 // pred_region
      %105 = dma.done [#allocation3], 16
    $region21: #{tpu_custom_call.1} parent=1 // pred_fallthru
      _
    %106 = vsyncpa [#allocation3], 1

</llo_original>
